<compile_context>
chip_gen: v7x
topology: tpu7x:2x2x1
jax: 0.10.0
libtpu: 0.0.40
codegen_flags: <defaults>
</compile_context>

<pallas_src>
import functools

import jax
import jax.numpy as jnp
from jax import lax
from jax.experimental import pallas as pl
from jax.experimental.pallas import tpu as pltpu

NUM_BODY = 5
NUM_PART = 10
LANES = 128                      # flattened elements folded into the lane dim
C_IN = NUM_BODY * LANES          # 640  input lanes per folded row
C_OUT = NUM_PART * LANES         # 1280 output lanes per folded row
_HALF = LANES // 2               # 64
_SHIFT_BITS = (5, 4, 3, 2, 1, 0)


def _round_up(x, m):
    return ((x + m - 1) // m) * m


def _spread_masks(rows):
    """Lane masks for the stretch-by-2 network (depend only on lane index)."""
    lane = lax.broadcasted_iota(jnp.int32, (rows, LANES), 1)
    spread = tuple(((lane >> (s + 1)) & 1) == 1 for s in _SHIFT_BITS)
    odd = (lane & 1) == 1
    return spread, odd


def _stretch2(col, spread, odd):
    """col: (rows, 128) with valid data in lanes [0, 64).

    Returns y with y[:, l] = col[:, l // 2] for all 128 lanes.  Element k
    (k < 64) is moved to lane 2k by conditional rotates of 32, 16, ..., 1
    lanes (the destination lane takes the rotated value iff bit s+1 of the
    lane index is set), then odd lanes copy their left neighbour.
    """
    a = col
    for s, m in zip(_SHIFT_BITS, spread):
        a = jnp.where(m, pltpu.roll(a, shift=1 << s, axis=1), a)
    return jnp.where(odd, pltpu.roll(a, shift=1, axis=1), a)


def _up_body2part_kernel(x_ref, o_ref, *, block_rows, chunk):
    """x_ref: (block_rows, 640), o_ref: (block_rows, 1280);
    computes o[r, c] = x[r, c // 2]."""
    # Loop-invariant lane masks: computed once per grid step (hoisted out of
    # the chunk loop - Mosaic won't reliably do this for us inside fori_loop).
    spread, odd = _spread_masks(chunk)

    def process(row0):
        x = x_ref[pl.ds(row0, chunk), :]                 # (chunk, 640)
        for h in range(NUM_PART):                        # 10 output vreg cols
            g = h // 2
            col = x[:, g * LANES:(g + 1) * LANES]        # (chunk, 128)
            if h % 2 == 1:
                # bring source lanes [64, 128) down to [0, 64)
                col = pltpu.roll(col, shift=_HALF, axis=1)
            # Direct, 128-lane-aligned store per piece (no concat temp).
            o_ref[pl.ds(row0, chunk), h * LANES:(h + 1) * LANES] = (
                _stretch2(col, spread, odd))

    num_chunks = block_rows // chunk                     # always exact
    if num_chunks == 1:
        process(0)
    else:
        def body(c, carry):
            process(pl.multiple_of(c * chunk, chunk))
            return carry
        lax.fori_loop(0, num_chunks, body, 0, unroll=2)


def _per_gen_config():
    """(row cap, vmem_limit_bytes).

    Conservative (1024 rows, 32 MiB) unless the device is positively
    identified as a 128 MiB-VMEM part (v5e / v6e).  v7x has only 64 MiB per
    TensorCore, so it must not get the 2048-row / 48 MiB configuration.
    """
    try:
        kind = jax.devices()[0].device_kind.lower()
    except Exception:
        kind = ""
    big_vmem = any(t in kind for t in
                   ("v5 lite", "v5e", "v5litepod", "v6 lite", "v6e"))
    if big_vmem:
        return 2048, 48 * 1024 * 1024
    return 1024, 32 * 1024 * 1024


def _pick_block_rows(num_rows, cap, chunk):
    """Largest multiple-of-`chunk` divisor of num_rows that is <= cap and
    leaves at least 2 grid steps (so both v7x TensorCores get work).  Falls
    back to num_rows only when the whole problem is a single chunk."""
    if num_rows <= chunk:
        return num_rows
    best = chunk                       # chunk always divides num_rows (padded)
    limit = min(cap, num_rows // 2)
    c = chunk
    while c <= limit:
        if num_rows % c == 0:
            best = c
        c += chunk
    return best


def up_body2part(body, *, block_rows=None):
    """Pallas forward of Up_Body2Part: out[..., j] = body[..., j // 2]."""
    N, d, T, w = body.shape
    assert w == NUM_BODY, f"expected last dim {NUM_BODY}, got {w}"
    dtype = body.dtype
    itemsize = jnp.dtype(dtype).itemsize
    M = N * d * T

    # Whole packed vregs per chunk: 8 rows (32-bit), 16 (16-bit), 32 (8-bit).
    chunk = {4: 8, 2: 16, 1: 32}.get(itemsize, 8)

    row_cap, vmem_limit = _per_gen_config()
    cap = row_cap if block_rows is None else max(chunk, min(block_rows, row_cap))

    # Fold groups of 128 flattened elements into the lane dimension; pad the
    # folded-row count to a multiple of `chunk` so there is never a ragged
    # remainder chunk and the grid gets >= 2 steps whenever possible.
    Mp = _round_up(M, LANES * chunk)

    flat = body.reshape(M, NUM_BODY)
    if Mp != M:
        flat = jnp.pad(flat, ((0, Mp - M), (0, 0)))
    R = Mp // LANES                        # multiple of chunk
    x2d = flat.reshape(R, C_IN)

    tr = _pick_block_rows(R, cap, chunk)
    assert R % tr == 0 and tr % chunk == 0

    out2d = pl.pallas_call(
        functools.partial(_up_body2part_kernel, block_rows=tr, chunk=chunk),
        out_shape=jax.ShapeDtypeStruct((R, C_OUT), dtype),
        grid_spec=pltpu.PrefetchScalarGridSpec(
            num_scalar_prefetch=0,
            grid=(R // tr,),
            in_specs=[pl.BlockSpec((tr, C_IN), lambda i: (i, 0))],
            out_specs=pl.BlockSpec((tr, C_OUT), lambda i: (i, 0)),
        ),
        compiler_params=pltpu.CompilerParams(
            dimension_semantics=("parallel",),
            vmem_limit_bytes=vmem_limit,
        ),
        cost_estimate=pl.CostEstimate(
            flops=0,
            transcendentals=0,
            bytes_accessed=Mp * (NUM_BODY + NUM_PART) * itemsize,
        ),
    )(x2d)

    out = out2d.reshape(Mp, NUM_PART)
    if Mp != M:
        out = out[:M]
    return out.reshape(N, d, T, NUM_PART)


def up_body2part_reference(body):
    # Pure-JAX reference mirroring the PyTorch forward.
    idx = jnp.arange(NUM_PART) // 2          # (0,0,1,1,2,2,3,3,4,4)
    return jnp.take(body, idx, axis=-1)


if __name__ == "__main__":
    key = jax.random.PRNGKey(0)
    keys = jax.random.split(key, 3)

    # Small shapes consistent with the forward (N, d, T, 5).  The three cases
    # cover: the aligned f32 path with a multi-step parallel grid, the 16-bit
    # packed path (chunk = 16), and the padded path (N*d*T % 128 != 0).
    cases = [
        ((2, 16, 64, NUM_BODY), jnp.float32),
        ((2, 16, 64, NUM_BODY), jnp.bfloat16),
        ((2, 3, 7, NUM_BODY), jnp.float32),
    ]

    fn = jax.jit(up_body2part)
    for kk, (shape, dt) in zip(keys, cases):
        x = jax.random.normal(kk, shape, dtype=jnp.float32).astype(dt)
        out = jax.block_until_ready(fn(x))
        ref = up_body2part_reference(x)
        assert out.shape == shape[:-1] + (NUM_PART,)
        assert out.dtype == dt
        assert jnp.array_equal(out, ref), f"mismatch for shape={shape} dtype={dt}"

    print("KERNEL_OK")
</pallas_src>

<mosaic_0001>
module attributes {stable_mosaic.version = 11 : i64} {
  func.func @_up_body2part_kernel(%arg0: i32, %arg1: memref<8x640xf32, #tpu.memory_space<vmem>>, %arg2: memref<8x1280xf32, #tpu.memory_space<vmem>>) attributes {dimension_semantics = [#tpu.dimension_semantics<parallel>], iteration_bounds = array<i64: 2>, scalar_prefetch = 0 : i64, scratch_operands = 0 : i64, tpu.core_type = #tpu.core_type<tc>, window_params = [{transform_indices = @transform_0, window_bounds = array<i64: 8, 640>}, {transform_indices = @transform_1, window_bounds = array<i64: 8, 1280>}]} {
    %0 = tpu.iota {dimensions = array<i32: 1>} : vector<8x128xi32>
    %c6_i32 = arith.constant 6 : i32
    %1 = vector.broadcast %c6_i32 : i32 to vector<8x128xi32>
    %2 = arith.shrsi %0, %1 : vector<8x128xi32>
    %c1_i32 = arith.constant 1 : i32
    %3 = vector.broadcast %c1_i32 : i32 to vector<8x128xi32>
    %4 = arith.andi %2, %3 : vector<8x128xi32>
    %c1_i32_0 = arith.constant 1 : i32
    %5 = vector.broadcast %c1_i32_0 : i32 to vector<8x128xi32>
    %6 = arith.cmpi eq, %4, %5 : vector<8x128xi32>
    %c5_i32 = arith.constant 5 : i32
    %7 = vector.broadcast %c5_i32 : i32 to vector<8x128xi32>
    %8 = arith.shrsi %0, %7 : vector<8x128xi32>
    %c1_i32_1 = arith.constant 1 : i32
    %9 = vector.broadcast %c1_i32_1 : i32 to vector<8x128xi32>
    %10 = arith.andi %8, %9 : vector<8x128xi32>
    %c1_i32_2 = arith.constant 1 : i32
    %11 = vector.broadcast %c1_i32_2 : i32 to vector<8x128xi32>
    %12 = arith.cmpi eq, %10, %11 : vector<8x128xi32>
    %c4_i32 = arith.constant 4 : i32
    %13 = vector.broadcast %c4_i32 : i32 to vector<8x128xi32>
    %14 = arith.shrsi %0, %13 : vector<8x128xi32>
    %c1_i32_3 = arith.constant 1 : i32
    %15 = vector.broadcast %c1_i32_3 : i32 to vector<8x128xi32>
    %16 = arith.andi %14, %15 : vector<8x128xi32>
    %c1_i32_4 = arith.constant 1 : i32
    %17 = vector.broadcast %c1_i32_4 : i32 to vector<8x128xi32>
    %18 = arith.cmpi eq, %16, %17 : vector<8x128xi32>
    %c3_i32 = arith.constant 3 : i32
    %19 = vector.broadcast %c3_i32 : i32 to vector<8x128xi32>
    %20 = arith.shrsi %0, %19 : vector<8x128xi32>
    %c1_i32_5 = arith.constant 1 : i32
    %21 = vector.broadcast %c1_i32_5 : i32 to vector<8x128xi32>
    %22 = arith.andi %20, %21 : vector<8x128xi32>
    %c1_i32_6 = arith.constant 1 : i32
    %23 = vector.broadcast %c1_i32_6 : i32 to vector<8x128xi32>
    %24 = arith.cmpi eq, %22, %23 : vector<8x128xi32>
    %c2_i32 = arith.constant 2 : i32
    %25 = vector.broadcast %c2_i32 : i32 to vector<8x128xi32>
    %26 = arith.shrsi %0, %25 : vector<8x128xi32>
    %c1_i32_7 = arith.constant 1 : i32
    %27 = vector.broadcast %c1_i32_7 : i32 to vector<8x128xi32>
    %28 = arith.andi %26, %27 : vector<8x128xi32>
    %c1_i32_8 = arith.constant 1 : i32
    %29 = vector.broadcast %c1_i32_8 : i32 to vector<8x128xi32>
    %30 = arith.cmpi eq, %28, %29 : vector<8x128xi32>
    %c1_i32_9 = arith.constant 1 : i32
    %31 = vector.broadcast %c1_i32_9 : i32 to vector<8x128xi32>
    %32 = arith.shrsi %0, %31 : vector<8x128xi32>
    %c1_i32_10 = arith.constant 1 : i32
    %33 = vector.broadcast %c1_i32_10 : i32 to vector<8x128xi32>
    %34 = arith.andi %32, %33 : vector<8x128xi32>
    %c1_i32_11 = arith.constant 1 : i32
    %35 = vector.broadcast %c1_i32_11 : i32 to vector<8x128xi32>
    %36 = arith.cmpi eq, %34, %35 : vector<8x128xi32>
    %c1_i32_12 = arith.constant 1 : i32
    %37 = vector.broadcast %c1_i32_12 : i32 to vector<8x128xi32>
    %38 = arith.andi %0, %37 : vector<8x128xi32>
    %c1_i32_13 = arith.constant 1 : i32
    %39 = vector.broadcast %c1_i32_13 : i32 to vector<8x128xi32>
    %40 = arith.cmpi eq, %38, %39 : vector<8x128xi32>
    %c0 = arith.constant 0 : index
    %c0_14 = arith.constant 0 : index
    %41 = vector.load %arg1[%c0, %c0_14] : memref<8x640xf32, #tpu.memory_space<vmem>>, vector<8x640xf32>
    %42 = vector.extract_strided_slice %41 {offsets = [0, 0], sizes = [8, 128], strides = [1, 1]} : vector<8x640xf32> to vector<8x128xf32>
    %c32_i32 = arith.constant 32 : i32
    %43 = tpu.dynamic_rotate %42 by %c32_i32 dim 1 : vector<8x128xf32>, i32 -> vector<8x128xf32>
    %44 = arith.select %6, %43, %42 : vector<8x128xi1>, vector<8x128xf32>
    %c16_i32 = arith.constant 16 : i32
    %45 = tpu.dynamic_rotate %44 by %c16_i32 dim 1 : vector<8x128xf32>, i32 -> vector<8x128xf32>
    %46 = arith.select %12, %45, %44 : vector<8x128xi1>, vector<8x128xf32>
    %c8_i32 = arith.constant 8 : i32
    %47 = tpu.dynamic_rotate %46 by %c8_i32 dim 1 : vector<8x128xf32>, i32 -> vector<8x128xf32>
    %48 = arith.select %18, %47, %46 : vector<8x128xi1>, vector<8x128xf32>
    %c4_i32_15 = arith.constant 4 : i32
    %49 = tpu.dynamic_rotate %48 by %c4_i32_15 dim 1 : vector<8x128xf32>, i32 -> vector<8x128xf32>
    %50 = arith.select %24, %49, %48 : vector<8x128xi1>, vector<8x128xf32>
    %c2_i32_16 = arith.constant 2 : i32
    %51 = tpu.dynamic_rotate %50 by %c2_i32_16 dim 1 : vector<8x128xf32>, i32 -> vector<8x128xf32>
    %52 = arith.select %30, %51, %50 : vector<8x128xi1>, vector<8x128xf32>
    %c1_i32_17 = arith.constant 1 : i32
    %53 = tpu.dynamic_rotate %52 by %c1_i32_17 dim 1 : vector<8x128xf32>, i32 -> vector<8x128xf32>
    %54 = arith.select %36, %53, %52 : vector<8x128xi1>, vector<8x128xf32>
    %c1_i32_18 = arith.constant 1 : i32
    %55 = tpu.dynamic_rotate %54 by %c1_i32_18 dim 1 : vector<8x128xf32>, i32 -> vector<8x128xf32>
    %56 = arith.select %40, %55, %54 : vector<8x128xi1>, vector<8x128xf32>
    %c0_19 = arith.constant 0 : index
    %c0_20 = arith.constant 0 : index
    %57 = vector.load %arg2[%c0_19, %c0_20] : memref<8x1280xf32, #tpu.memory_space<vmem>>, vector<8x128xf32>
    tpu.vector_store %arg2[%c0_19, %c0_20], %56 {strides = array<i32>} : memref<8x1280xf32, #tpu.memory_space<vmem>>, vector<8x128xf32>,
    %58 = vector.extract_strided_slice %41 {offsets = [0, 0], sizes = [8, 128], strides = [1, 1]} : vector<8x640xf32> to vector<8x128xf32>
    %c64_i32 = arith.constant 64 : i32
    %59 = tpu.dynamic_rotate %58 by %c64_i32 dim 1 : vector<8x128xf32>, i32 -> vector<8x128xf32>
    %c32_i32_21 = arith.constant 32 : i32
    %60 = tpu.dynamic_rotate %59 by %c32_i32_21 dim 1 : vector<8x128xf32>, i32 -> vector<8x128xf32>
    %61 = arith.select %6, %60, %59 : vector<8x128xi1>, vector<8x128xf32>
    %c16_i32_22 = arith.constant 16 : i32
    %62 = tpu.dynamic_rotate %61 by %c16_i32_22 dim 1 : vector<8x128xf32>, i32 -> vector<8x128xf32>
    %63 = arith.select %12, %62, %61 : vector<8x128xi1>, vector<8x128xf32>
    %c8_i32_23 = arith.constant 8 : i32
    %64 = tpu.dynamic_rotate %63 by %c8_i32_23 dim 1 : vector<8x128xf32>, i32 -> vector<8x128xf32>
    %65 = arith.select %18, %64, %63 : vector<8x128xi1>, vector<8x128xf32>
    %c4_i32_24 = arith.constant 4 : i32
    %66 = tpu.dynamic_rotate %65 by %c4_i32_24 dim 1 : vector<8x128xf32>, i32 -> vector<8x128xf32>
    %67 = arith.select %24, %66, %65 : vector<8x128xi1>, vector<8x128xf32>
    %c2_i32_25 = arith.constant 2 : i32
    %68 = tpu.dynamic_rotate %67 by %c2_i32_25 dim 1 : vector<8x128xf32>, i32 -> vector<8x128xf32>
    %69 = arith.select %30, %68, %67 : vector<8x128xi1>, vector<8x128xf32>
    %c1_i32_26 = arith.constant 1 : i32
    %70 = tpu.dynamic_rotate %69 by %c1_i32_26 dim 1 : vector<8x128xf32>, i32 -> vector<8x128xf32>
    %71 = arith.select %36, %70, %69 : vector<8x128xi1>, vector<8x128xf32>
    %c1_i32_27 = arith.constant 1 : i32
    %72 = tpu.dynamic_rotate %71 by %c1_i32_27 dim 1 : vector<8x128xf32>, i32 -> vector<8x128xf32>
    %73 = arith.select %40, %72, %71 : vector<8x128xi1>, vector<8x128xf32>
    %c0_28 = arith.constant 0 : index
    %c128 = arith.constant 128 : index
    %74 = vector.load %arg2[%c0_28, %c128] : memref<8x1280xf32, #tpu.memory_space<vmem>>, vector<8x128xf32>
    tpu.vector_store %arg2[%c0_28, %c128], %73 {strides = array<i32>} : memref<8x1280xf32, #tpu.memory_space<vmem>>, vector<8x128xf32>,
    %75 = vector.extract_strided_slice %41 {offsets = [0, 128], sizes = [8, 128], strides = [1, 1]} : vector<8x640xf32> to vector<8x128xf32>
    %c32_i32_29 = arith.constant 32 : i32
    %76 = tpu.dynamic_rotate %75 by %c32_i32_29 dim 1 : vector<8x128xf32>, i32 -> vector<8x128xf32>
    %77 = arith.select %6, %76, %75 : vector<8x128xi1>, vector<8x128xf32>
    %c16_i32_30 = arith.constant 16 : i32
    %78 = tpu.dynamic_rotate %77 by %c16_i32_30 dim 1 : vector<8x128xf32>, i32 -> vector<8x128xf32>
    %79 = arith.select %12, %78, %77 : vector<8x128xi1>, vector<8x128xf32>
    %c8_i32_31 = arith.constant 8 : i32
    %80 = tpu.dynamic_rotate %79 by %c8_i32_31 dim 1 : vector<8x128xf32>, i32 -> vector<8x128xf32>
    %81 = arith.select %18, %80, %79 : vector<8x128xi1>, vector<8x128xf32>
    %c4_i32_32 = arith.constant 4 : i32
    %82 = tpu.dynamic_rotate %81 by %c4_i32_32 dim 1 : vector<8x128xf32>, i32 -> vector<8x128xf32>
    %83 = arith.select %24, %82, %81 : vector<8x128xi1>, vector<8x128xf32>
    %c2_i32_33 = arith.constant 2 : i32
    %84 = tpu.dynamic_rotate %83 by %c2_i32_33 dim 1 : vector<8x128xf32>, i32 -> vector<8x128xf32>
    %85 = arith.select %30, %84, %83 : vector<8x128xi1>, vector<8x128xf32>
    %c1_i32_34 = arith.constant 1 : i32
    %86 = tpu.dynamic_rotate %85 by %c1_i32_34 dim 1 : vector<8x128xf32>, i32 -> vector<8x128xf32>
    %87 = arith.select %36, %86, %85 : vector<8x128xi1>, vector<8x128xf32>
    %c1_i32_35 = arith.constant 1 : i32
    %88 = tpu.dynamic_rotate %87 by %c1_i32_35 dim 1 : vector<8x128xf32>, i32 -> vector<8x128xf32>
    %89 = arith.select %40, %88, %87 : vector<8x128xi1>, vector<8x128xf32>
    %c0_36 = arith.constant 0 : index
    %c256 = arith.constant 256 : index
    %90 = vector.load %arg2[%c0_36, %c256] : memref<8x1280xf32, #tpu.memory_space<vmem>>, vector<8x128xf32>
    tpu.vector_store %arg2[%c0_36, %c256], %89 {strides = array<i32>} : memref<8x1280xf32, #tpu.memory_space<vmem>>, vector<8x128xf32>,
    %91 = vector.extract_strided_slice %41 {offsets = [0, 128], sizes = [8, 128], strides = [1, 1]} : vector<8x640xf32> to vector<8x128xf32>
    %c64_i32_37 = arith.constant 64 : i32
    %92 = tpu.dynamic_rotate %91 by %c64_i32_37 dim 1 : vector<8x128xf32>, i32 -> vector<8x128xf32>
    %c32_i32_38 = arith.constant 32 : i32
    %93 = tpu.dynamic_rotate %92 by %c32_i32_38 dim 1 : vector<8x128xf32>, i32 -> vector<8x128xf32>
    %94 = arith.select %6, %93, %92 : vector<8x128xi1>, vector<8x128xf32>
    %c16_i32_39 = arith.constant 16 : i32
    %95 = tpu.dynamic_rotate %94 by %c16_i32_39 dim 1 : vector<8x128xf32>, i32 -> vector<8x128xf32>
    %96 = arith.select %12, %95, %94 : vector<8x128xi1>, vector<8x128xf32>
    %c8_i32_40 = arith.constant 8 : i32
    %97 = tpu.dynamic_rotate %96 by %c8_i32_40 dim 1 : vector<8x128xf32>, i32 -> vector<8x128xf32>
    %98 = arith.select %18, %97, %96 : vector<8x128xi1>, vector<8x128xf32>
    %c4_i32_41 = arith.constant 4 : i32
    %99 = tpu.dynamic_rotate %98 by %c4_i32_41 dim 1 : vector<8x128xf32>, i32 -> vector<8x128xf32>
    %100 = arith.select %24, %99, %98 : vector<8x128xi1>, vector<8x128xf32>
    %c2_i32_42 = arith.constant 2 : i32
    %101 = tpu.dynamic_rotate %100 by %c2_i32_42 dim 1 : vector<8x128xf32>, i32 -> vector<8x128xf32>
    %102 = arith.select %30, %101, %100 : vector<8x128xi1>, vector<8x128xf32>
    %c1_i32_43 = arith.constant 1 : i32
    %103 = tpu.dynamic_rotate %102 by %c1_i32_43 dim 1 : vector<8x128xf32>, i32 -> vector<8x128xf32>
    %104 = arith.select %36, %103, %102 : vector<8x128xi1>, vector<8x128xf32>
    %c1_i32_44 = arith.constant 1 : i32
    %105 = tpu.dynamic_rotate %104 by %c1_i32_44 dim 1 : vector<8x128xf32>, i32 -> vector<8x128xf32>
    %106 = arith.select %40, %105, %104 : vector<8x128xi1>, vector<8x128xf32>
    %c0_45 = arith.constant 0 : index
    %c384 = arith.constant 384 : index
    %107 = vector.load %arg2[%c0_45, %c384] : memref<8x1280xf32, #tpu.memory_space<vmem>>, vector<8x128xf32>
    tpu.vector_store %arg2[%c0_45, %c384], %106 {strides = array<i32>} : memref<8x1280xf32, #tpu.memory_space<vmem>>, vector<8x128xf32>,
    %108 = vector.extract_strided_slice %41 {offsets = [0, 256], sizes = [8, 128], strides = [1, 1]} : vector<8x640xf32> to vector<8x128xf32>
    %c32_i32_46 = arith.constant 32 : i32
    %109 = tpu.dynamic_rotate %108 by %c32_i32_46 dim 1 : vector<8x128xf32>, i32 -> vector<8x128xf32>
    %110 = arith.select %6, %109, %108 : vector<8x128xi1>, vector<8x128xf32>
    %c16_i32_47 = arith.constant 16 : i32
    %111 = tpu.dynamic_rotate %110 by %c16_i32_47 dim 1 : vector<8x128xf32>, i32 -> vector<8x128xf32>
    %112 = arith.select %12, %111, %110 : vector<8x128xi1>, vector<8x128xf32>
    %c8_i32_48 = arith.constant 8 : i32
    %113 = tpu.dynamic_rotate %112 by %c8_i32_48 dim 1 : vector<8x128xf32>, i32 -> vector<8x128xf32>
    %114 = arith.select %18, %113, %112 : vector<8x128xi1>, vector<8x128xf32>
    %c4_i32_49 = arith.constant 4 : i32
    %115 = tpu.dynamic_rotate %114 by %c4_i32_49 dim 1 : vector<8x128xf32>, i32 -> vector<8x128xf32>
    %116 = arith.select %24, %115, %114 : vector<8x128xi1>, vector<8x128xf32>
    %c2_i32_50 = arith.constant 2 : i32
    %117 = tpu.dynamic_rotate %116 by %c2_i32_50 dim 1 : vector<8x128xf32>, i32 -> vector<8x128xf32>
    %118 = arith.select %30, %117, %116 : vector<8x128xi1>, vector<8x128xf32>
    %c1_i32_51 = arith.constant 1 : i32
    %119 = tpu.dynamic_rotate %118 by %c1_i32_51 dim 1 : vector<8x128xf32>, i32 -> vector<8x128xf32>
    %120 = arith.select %36, %119, %118 : vector<8x128xi1>, vector<8x128xf32>
    %c1_i32_52 = arith.constant 1 : i32
    %121 = tpu.dynamic_rotate %120 by %c1_i32_52 dim 1 : vector<8x128xf32>, i32 -> vector<8x128xf32>
    %122 = arith.select %40, %121, %120 : vector<8x128xi1>, vector<8x128xf32>
    %c0_53 = arith.constant 0 : index
    %c512 = arith.constant 512 : index
    %123 = vector.load %arg2[%c0_53, %c512] : memref<8x1280xf32, #tpu.memory_space<vmem>>, vector<8x128xf32>
    tpu.vector_store %arg2[%c0_53, %c512], %122 {strides = array<i32>} : memref<8x1280xf32, #tpu.memory_space<vmem>>, vector<8x128xf32>,
    %124 = vector.extract_strided_slice %41 {offsets = [0, 256], sizes = [8, 128], strides = [1, 1]} : vector<8x640xf32> to vector<8x128xf32>
    %c64_i32_54 = arith.constant 64 : i32
    %125 = tpu.dynamic_rotate %124 by %c64_i32_54 dim 1 : vector<8x128xf32>, i32 -> vector<8x128xf32>
    %c32_i32_55 = arith.constant 32 : i32
    %126 = tpu.dynamic_rotate %125 by %c32_i32_55 dim 1 : vector<8x128xf32>, i32 -> vector<8x128xf32>
    %127 = arith.select %6, %126, %125 : vector<8x128xi1>, vector<8x128xf32>
    %c16_i32_56 = arith.constant 16 : i32
    %128 = tpu.dynamic_rotate %127 by %c16_i32_56 dim 1 : vector<8x128xf32>, i32 -> vector<8x128xf32>
    %129 = arith.select %12, %128, %127 : vector<8x128xi1>, vector<8x128xf32>
    %c8_i32_57 = arith.constant 8 : i32
    %130 = tpu.dynamic_rotate %129 by %c8_i32_57 dim 1 : vector<8x128xf32>, i32 -> vector<8x128xf32>
    %131 = arith.select %18, %130, %129 : vector<8x128xi1>, vector<8x128xf32>
    %c4_i32_58 = arith.constant 4 : i32
    %132 = tpu.dynamic_rotate %131 by %c4_i32_58 dim 1 : vector<8x128xf32>, i32 -> vector<8x128xf32>
    %133 = arith.select %24, %132, %131 : vector<8x128xi1>, vector<8x128xf32>
    %c2_i32_59 = arith.constant 2 : i32
    %134 = tpu.dynamic_rotate %133 by %c2_i32_59 dim 1 : vector<8x128xf32>, i32 -> vector<8x128xf32>
    %135 = arith.select %30, %134, %133 : vector<8x128xi1>, vector<8x128xf32>
    %c1_i32_60 = arith.constant 1 : i32
    %136 = tpu.dynamic_rotate %135 by %c1_i32_60 dim 1 : vector<8x128xf32>, i32 -> vector<8x128xf32>
    %137 = arith.select %36, %136, %135 : vector<8x128xi1>, vector<8x128xf32>
    %c1_i32_61 = arith.constant 1 : i32
    %138 = tpu.dynamic_rotate %137 by %c1_i32_61 dim 1 : vector<8x128xf32>, i32 -> vector<8x128xf32>
    %139 = arith.select %40, %138, %137 : vector<8x128xi1>, vector<8x128xf32>
    %c0_62 = arith.constant 0 : index
    %c640 = arith.constant 640 : index
    %140 = vector.load %arg2[%c0_62, %c640] : memref<8x1280xf32, #tpu.memory_space<vmem>>, vector<8x128xf32>
    tpu.vector_store %arg2[%c0_62, %c640], %139 {strides = array<i32>} : memref<8x1280xf32, #tpu.memory_space<vmem>>, vector<8x128xf32>,
    %141 = vector.extract_strided_slice %41 {offsets = [0, 384], sizes = [8, 128], strides = [1, 1]} : vector<8x640xf32> to vector<8x128xf32>
    %c32_i32_63 = arith.constant 32 : i32
    %142 = tpu.dynamic_rotate %141 by %c32_i32_63 dim 1 : vector<8x128xf32>, i32 -> vector<8x128xf32>
    %143 = arith.select %6, %142, %141 : vector<8x128xi1>, vector<8x128xf32>
    %c16_i32_64 = arith.constant 16 : i32
    %144 = tpu.dynamic_rotate %143 by %c16_i32_64 dim 1 : vector<8x128xf32>, i32 -> vector<8x128xf32>
    %145 = arith.select %12, %144, %143 : vector<8x128xi1>, vector<8x128xf32>
    %c8_i32_65 = arith.constant 8 : i32
    %146 = tpu.dynamic_rotate %145 by %c8_i32_65 dim 1 : vector<8x128xf32>, i32 -> vector<8x128xf32>
    %147 = arith.select %18, %146, %145 : vector<8x128xi1>, vector<8x128xf32>
    %c4_i32_66 = arith.constant 4 : i32
    %148 = tpu.dynamic_rotate %147 by %c4_i32_66 dim 1 : vector<8x128xf32>, i32 -> vector<8x128xf32>
    %149 = arith.select %24, %148, %147 : vector<8x128xi1>, vector<8x128xf32>
    %c2_i32_67 = arith.constant 2 : i32
    %150 = tpu.dynamic_rotate %149 by %c2_i32_67 dim 1 : vector<8x128xf32>, i32 -> vector<8x128xf32>
    %151 = arith.select %30, %150, %149 : vector<8x128xi1>, vector<8x128xf32>
    %c1_i32_68 = arith.constant 1 : i32
    %152 = tpu.dynamic_rotate %151 by %c1_i32_68 dim 1 : vector<8x128xf32>, i32 -> vector<8x128xf32>
    %153 = arith.select %36, %152, %151 : vector<8x128xi1>, vector<8x128xf32>
    %c1_i32_69 = arith.constant 1 : i32
    %154 = tpu.dynamic_rotate %153 by %c1_i32_69 dim 1 : vector<8x128xf32>, i32 -> vector<8x128xf32>
    %155 = arith.select %40, %154, %153 : vector<8x128xi1>, vector<8x128xf32>
    %c0_70 = arith.constant 0 : index
    %c768 = arith.constant 768 : index
    %156 = vector.load %arg2[%c0_70, %c768] : memref<8x1280xf32, #tpu.memory_space<vmem>>, vector<8x128xf32>
    tpu.vector_store %arg2[%c0_70, %c768], %155 {strides = array<i32>} : memref<8x1280xf32, #tpu.memory_space<vmem>>, vector<8x128xf32>,
    %157 = vector.extract_strided_slice %41 {offsets = [0, 384], sizes = [8, 128], strides = [1, 1]} : vector<8x640xf32> to vector<8x128xf32>
    %c64_i32_71 = arith.constant 64 : i32
    %158 = tpu.dynamic_rotate %157 by %c64_i32_71 dim 1 : vector<8x128xf32>, i32 -> vector<8x128xf32>
    %c32_i32_72 = arith.constant 32 : i32
    %159 = tpu.dynamic_rotate %158 by %c32_i32_72 dim 1 : vector<8x128xf32>, i32 -> vector<8x128xf32>
    %160 = arith.select %6, %159, %158 : vector<8x128xi1>, vector<8x128xf32>
    %c16_i32_73 = arith.constant 16 : i32
    %161 = tpu.dynamic_rotate %160 by %c16_i32_73 dim 1 : vector<8x128xf32>, i32 -> vector<8x128xf32>
    %162 = arith.select %12, %161, %160 : vector<8x128xi1>, vector<8x128xf32>
    %c8_i32_74 = arith.constant 8 : i32
    %163 = tpu.dynamic_rotate %162 by %c8_i32_74 dim 1 : vector<8x128xf32>, i32 -> vector<8x128xf32>
    %164 = arith.select %18, %163, %162 : vector<8x128xi1>, vector<8x128xf32>
    %c4_i32_75 = arith.constant 4 : i32
    %165 = tpu.dynamic_rotate %164 by %c4_i32_75 dim 1 : vector<8x128xf32>, i32 -> vector<8x128xf32>
    %166 = arith.select %24, %165, %164 : vector<8x128xi1>, vector<8x128xf32>
    %c2_i32_76 = arith.constant 2 : i32
    %167 = tpu.dynamic_rotate %166 by %c2_i32_76 dim 1 : vector<8x128xf32>, i32 -> vector<8x128xf32>
    %168 = arith.select %30, %167, %166 : vector<8x128xi1>, vector<8x128xf32>
    %c1_i32_77 = arith.constant 1 : i32
    %169 = tpu.dynamic_rotate %168 by %c1_i32_77 dim 1 : vector<8x128xf32>, i32 -> vector<8x128xf32>
    %170 = arith.select %36, %169, %168 : vector<8x128xi1>, vector<8x128xf32>
    %c1_i32_78 = arith.constant 1 : i32
    %171 = tpu.dynamic_rotate %170 by %c1_i32_78 dim 1 : vector<8x128xf32>, i32 -> vector<8x128xf32>
    %172 = arith.select %40, %171, %170 : vector<8x128xi1>, vector<8x128xf32>
    %c0_79 = arith.constant 0 : index
    %c896 = arith.constant 896 : index
    %173 = vector.load %arg2[%c0_79, %c896] : memref<8x1280xf32, #tpu.memory_space<vmem>>, vector<8x128xf32>
    tpu.vector_store %arg2[%c0_79, %c896], %172 {strides = array<i32>} : memref<8x1280xf32, #tpu.memory_space<vmem>>, vector<8x128xf32>,
    %174 = vector.extract_strided_slice %41 {offsets = [0, 512], sizes = [8, 128], strides = [1, 1]} : vector<8x640xf32> to vector<8x128xf32>
    %c32_i32_80 = arith.constant 32 : i32
    %175 = tpu.dynamic_rotate %174 by %c32_i32_80 dim 1 : vector<8x128xf32>, i32 -> vector<8x128xf32>
    %176 = arith.select %6, %175, %174 : vector<8x128xi1>, vector<8x128xf32>
    %c16_i32_81 = arith.constant 16 : i32
    %177 = tpu.dynamic_rotate %176 by %c16_i32_81 dim 1 : vector<8x128xf32>, i32 -> vector<8x128xf32>
    %178 = arith.select %12, %177, %176 : vector<8x128xi1>, vector<8x128xf32>
    %c8_i32_82 = arith.constant 8 : i32
    %179 = tpu.dynamic_rotate %178 by %c8_i32_82 dim 1 : vector<8x128xf32>, i32 -> vector<8x128xf32>
    %180 = arith.select %18, %179, %178 : vector<8x128xi1>, vector<8x128xf32>
    %c4_i32_83 = arith.constant 4 : i32
    %181 = tpu.dynamic_rotate %180 by %c4_i32_83 dim 1 : vector<8x128xf32>, i32 -> vector<8x128xf32>
    %182 = arith.select %24, %181, %180 : vector<8x128xi1>, vector<8x128xf32>
    %c2_i32_84 = arith.constant 2 : i32
    %183 = tpu.dynamic_rotate %182 by %c2_i32_84 dim 1 : vector<8x128xf32>, i32 -> vector<8x128xf32>
    %184 = arith.select %30, %183, %182 : vector<8x128xi1>, vector<8x128xf32>
    %c1_i32_85 = arith.constant 1 : i32
    %185 = tpu.dynamic_rotate %184 by %c1_i32_85 dim 1 : vector<8x128xf32>, i32 -> vector<8x128xf32>
    %186 = arith.select %36, %185, %184 : vector<8x128xi1>, vector<8x128xf32>
    %c1_i32_86 = arith.constant 1 : i32
    %187 = tpu.dynamic_rotate %186 by %c1_i32_86 dim 1 : vector<8x128xf32>, i32 -> vector<8x128xf32>
    %188 = arith.select %40, %187, %186 : vector<8x128xi1>, vector<8x128xf32>
    %c0_87 = arith.constant 0 : index
    %c1024 = arith.constant 1024 : index
    %189 = vector.load %arg2[%c0_87, %c1024] : memref<8x1280xf32, #tpu.memory_space<vmem>>, vector<8x128xf32>
    tpu.vector_store %arg2[%c0_87, %c1024], %188 {strides = array<i32>} : memref<8x1280xf32, #tpu.memory_space<vmem>>, vector<8x128xf32>,
    %190 = vector.extract_strided_slice %41 {offsets = [0, 512], sizes = [8, 128], strides = [1, 1]} : vector<8x640xf32> to vector<8x128xf32>
    %c64_i32_88 = arith.constant 64 : i32
    %191 = tpu.dynamic_rotate %190 by %c64_i32_88 dim 1 : vector<8x128xf32>, i32 -> vector<8x128xf32>
    %c32_i32_89 = arith.constant 32 : i32
    %192 = tpu.dynamic_rotate %191 by %c32_i32_89 dim 1 : vector<8x128xf32>, i32 -> vector<8x128xf32>
    %193 = arith.select %6, %192, %191 : vector<8x128xi1>, vector<8x128xf32>
    %c16_i32_90 = arith.constant 16 : i32
    %194 = tpu.dynamic_rotate %193 by %c16_i32_90 dim 1 : vector<8x128xf32>, i32 -> vector<8x128xf32>
    %195 = arith.select %12, %194, %193 : vector<8x128xi1>, vector<8x128xf32>
    %c8_i32_91 = arith.constant 8 : i32
    %196 = tpu.dynamic_rotate %195 by %c8_i32_91 dim 1 : vector<8x128xf32>, i32 -> vector<8x128xf32>
    %197 = arith.select %18, %196, %195 : vector<8x128xi1>, vector<8x128xf32>
    %c4_i32_92 = arith.constant 4 : i32
    %198 = tpu.dynamic_rotate %197 by %c4_i32_92 dim 1 : vector<8x128xf32>, i32 -> vector<8x128xf32>
    %199 = arith.select %24, %198, %197 : vector<8x128xi1>, vector<8x128xf32>
    %c2_i32_93 = arith.constant 2 : i32
    %200 = tpu.dynamic_rotate %199 by %c2_i32_93 dim 1 : vector<8x128xf32>, i32 -> vector<8x128xf32>
    %201 = arith.select %30, %200, %199 : vector<8x128xi1>, vector<8x128xf32>
    %c1_i32_94 = arith.constant 1 : i32
    %202 = tpu.dynamic_rotate %201 by %c1_i32_94 dim 1 : vector<8x128xf32>, i32 -> vector<8x128xf32>
    %203 = arith.select %36, %202, %201 : vector<8x128xi1>, vector<8x128xf32>
    %c1_i32_95 = arith.constant 1 : i32
    %204 = tpu.dynamic_rotate %203 by %c1_i32_95 dim 1 : vector<8x128xf32>, i32 -> vector<8x128xf32>
    %205 = arith.select %40, %204, %203 : vector<8x128xi1>, vector<8x128xf32>
    %c0_96 = arith.constant 0 : index
    %c1152 = arith.constant 1152 : index
    %206 = vector.load %arg2[%c0_96, %c1152] : memref<8x1280xf32, #tpu.memory_space<vmem>>, vector<8x128xf32>
    tpu.vector_store %arg2[%c0_96, %c1152], %205 {strides = array<i32>} : memref<8x1280xf32, #tpu.memory_space<vmem>>, vector<8x128xf32>,
    return
  }
  func.func @transform_0(%arg0: i32) -> (i32, i32) {
    %c0_i32 = arith.constant 0 : i32
    %c0_i32_0 = arith.constant 0 : i32
    return %arg0, %c0_i32 : i32, i32
  }
  func.func @transform_1(%arg0: i32) -> (i32, i32) {
    %c0_i32 = arith.constant 0 : i32
    %c0_i32_0 = arith.constant 0 : i32
    return %arg0, %c0_i32 : i32, i32
  }
}

</mosaic_0001>

<llo_original>
// kernel: up_body2part.1
$region0: #{up_body2part.1}
  #allocation0 [shape = 'u32[]', space=smem, size = 0x4, offset = 0x4, fixed_abs, tag = 'smem constant byte address 0x4 - core index']
  #allocation1 [shape = 'u32[144,128]{1,0:T(1,128)}', space=vmem, size = 0x12000, scoped, tag = 'internal scratch']
  %s0 = inlined_call_operand.vmem [shape: f32[16,640], index: 0, kind: input, shape index: {}]
  %s1 = inlined_call_operand.vmem [shape: f32[16,1280], index: 1, kind: output, shape index: {}]
  %s2 = sld [smem:[#allocation0]]
  $region37: #{up_body2part.1} parent=0
    _
  %s4 = ssub.s32 1, %s2
  %s5 = scalar_select 0, %s4, %s2
  loop: start=0, step=1, limit=4
  $region2: #{up_body2part.1} parent=0 // loop_pre_header
    _
  $region3: #{up_body2part.1} parent=0 // loop_header
    %s7 = sphi 0, %s11
    %p8 = scmp.ge.s32.totalorder %s7, 4
    %s17 = sphi 0, %s19
    %s20 = sphi 0, %s17
    %s21 = sphi 0, %s20
    %s37 = sphi 0, %s21
    %s43 = sphi 0, %s45
    %s46 = sphi 0, %s43
    %s47 = sphi 0, %s46
    %s63 = sphi 0, %s47
  $region4: #{up_body2part.1} parent=0 // loop_header_branch
    %10 = sbr.rel (%p8) target = $region8
  $region5: #{up_body2part.1} parent=0 // loop_body
    %s12 = ssub.s32 %s7, 1
    %s13 = ssub.s32 %s7, 2
    %s14 = sadd.s32 %s7, 1
    %s15 = ssub.s32 %s7, %s14
    %p16 = scmp.eq.s32.totalorder %s15, 0
    %s18 = sadd.s32 %s17, 1
    %s19 = scalar_select %p16, %s17, %s18
    %p22 = pneg %p16
    %p23 = scmp.eq.s32.totalorder %s7, 1
    %p24 = por %p22, %p23
    %p25 = scmp.ne.s32.totalorder %s17, %s20
    %p26 = scmp.eq.s32.totalorder %s7, 0
    %p27 = por %p25, %p26
    %p28 = scmp.ne.s32.totalorder %s17, %s20
    %p29 = scmp.eq.s32.totalorder %s12, 1
    %p30 = por %p28, %p29
    %p31 = scmp.ne.s32.totalorder %s20, %s21
    %p32 = scmp.eq.s32.totalorder %s12, 0
    %p33 = por %p31, %p32
    %p34 = scmp.ne.s32.totalorder %s20, %s21
    %p35 = scmp.eq.s32.totalorder %s13, 1
    %p36 = por %p34, %p35
    %p38 = scmp.ne.s32.totalorder %s21, %s37
    %p39 = scmp.eq.s32.totalorder %s13, 0
    %p40 = por %p38, %p39
    %s41 = ssub.s32 %s7, %s14
    %p42 = scmp.eq.s32.totalorder %s41, 0
    %s44 = sadd.s32 %s43, 1
    %s45 = scalar_select %p42, %s43, %s44
    %p48 = pneg %p42
    %p49 = scmp.eq.s32.totalorder %s7, 1
    %p50 = por %p48, %p49
    %p51 = scmp.ne.s32.totalorder %s43, %s46
    %p52 = scmp.eq.s32.totalorder %s7, 0
    %p53 = por %p51, %p52
    %p54 = scmp.ne.s32.totalorder %s43, %s46
    %p55 = scmp.eq.s32.totalorder %s12, 1
    %p56 = por %p54, %p55
    %p57 = scmp.ne.s32.totalorder %s46, %s47
    %p58 = scmp.eq.s32.totalorder %s12, 0
    %p59 = por %p57, %p58
    %p60 = scmp.ne.s32.totalorder %s46, %s47
    %p61 = scmp.eq.s32.totalorder %s13, 1
    %p62 = por %p60, %p61
    %p64 = scmp.ne.s32.totalorder %s47, %s63
    %p65 = scmp.eq.s32.totalorder %s13, 0
    %p66 = por %p64, %p65
    %p67 = scmp.le.s32.totalorder 1, %s7
    %p68 = scmp.lt.s32.totalorder %s7, 3
    %p69 = pnand %p67, %p68
    %p70 = pneg %p69
    // Predicated region
    $region9: #{up_body2part.1} parent=5 // pred_check
      _
    $region10: #{up_body2part.1} parent=5 // pred_check_branch
      %72 = sbr.rel (%p69) target = $region12
    $region11: #{up_body2part.1} parent=5 // pred_region
      %s73 = ssub.s32 %s7, 1
    $region12: #{up_body2part.1} parent=5 // pred_fallthru
      _
    %p74 = scmp.lt.s32.totalorder %s7, 2
    // Predicated region
    $region13: #{up_body2part.1} parent=5 // pred_check
      %p75 = pneg %p74
    $region14: #{up_body2part.1} parent=5 // pred_check_branch
      %77 = sbr.rel (%p75) target = $region16
    $region15: #{up_body2part.1} parent=5 // pred_region
      // Predicated region
      $region17: #{up_body2part.1} parent=15 // pred_check
        %p78 = pneg %p27
      $region18: #{up_body2part.1} parent=15 // pred_check_branch
        %80 = sbr.rel (%p78) target = $region20
      $region19: #{up_body2part.1} parent=15 // pred_region
        %p81 = scmp.lt.s32.totalorder %s7, 1
        %s82 = scalar_select %p81, %s7, 1
        %s83 = smul.addr %s82, 5
        %s84 = smul.addr %s83, 8
        %s85 = scalar_lea.vmem %s0, %s84
      $region20: #{up_body2part.1} parent=15 // pred_fallthru
        _
    $region16: #{up_body2part.1} parent=5 // pred_fallthru
      _
    %p86 = scmp.le.s32.totalorder 1, %s7
    %p87 = scmp.lt.s32.totalorder %s7, 3
    %p88 = pnand %p86, %p87
    %p89 = pneg %p88
    // Predicated region
    $region21: #{up_body2part.1} parent=5 // pred_check
      _
    $region22: #{up_body2part.1} parent=5 // pred_check_branch
      %91 = sbr.rel (%p88) target = $region24
    $region23: #{up_body2part.1} parent=5 // pred_region
      %s92 = ssub.s32 %s7, 1
      %p93 = scmp.lt.s32.totalorder %s12, 1
      %s94 = scalar_select %p93, %s12, 1
      %s95 = smul.addr %s94, 5
      %s96 = smul.addr %s95, 8
      %s97 = scalar_lea.vmem %s0, %s96
      %p98 = pneg %p33
      %p99 = pneg %p30
      %p100 = pneg %p59
      %p101 = pneg %p56
      %p102 = scmp.lt.s32.totalorder %s12, 1
      %s103 = scalar_select %p102, %s12, 1
      %s104 = smul.addr %s103, 10
      %s105 = smul.addr %s104, 8
      %s106 = scalar_lea.vmem %s1, %s105
      %p107 = scmp.lt.s32.totalorder %s12, 1
      %s108 = scalar_select %p107, %s12, 1
      %s109 = smul.addr %s108, 5
      %s110 = smul.addr %s109, 8
      %s111 = scalar_lea.vmem %s0, %s110
      %p112 = scmp.lt.s32.totalorder %s12, 1
      %s113 = scalar_select %p112, %s12, 1
      %s114 = smul.addr %s113, 10
      %s115 = smul.addr %s114, 8
      %s116 = scalar_lea.vmem %s1, %s115
      %v117 = vlaneseq
      %v118 = vand.u32 %v117, 127
      %v119 = vshra.s32 %v118, 6
      %v120 = vand.u32 %v119, 1
      %vm121 = vcmp.eq.s32.totalorder %v120, 1
      %v122 = vshra.s32 %v118, 5
      %v123 = vand.u32 %v122, 1
      %vm124 = vcmp.eq.s32.totalorder %v123, 1
      %v125 = vshra.s32 %v118, 4
      %v126 = vand.u32 %v125, 1
      %vm127 = vcmp.eq.s32.totalorder %v126, 1
      %v128 = vshra.s32 %v118, 3
      %v129 = vand.u32 %v128, 1
      %vm130 = vcmp.eq.s32.totalorder %v129, 1
      %v131 = vshra.s32 %v118, 2
      %v132 = vand.u32 %v131, 1
      %vm133 = vcmp.eq.s32.totalorder %v132, 1
      %v134 = vshra.s32 %v118, 1
      %v135 = vand.u32 %v134, 1
      %vm136 = vcmp.eq.s32.totalorder %v135, 1
      %v137 = vand.u32 %v118, 1
      %vm138 = vcmp.eq.s32.totalorder %v137, 1
      %v139 = vld [vmem:[%s111] sm:$0xff]
      %v140 = vld [vmem:[%s111 + $0x8] sm:$0xff]
      %v141 = vld [vmem:[%s111 + $0x10] sm:$0xff]
      %v142 = vld [vmem:[%s111 + $0x18] sm:$0xff]
      %v143 = vld [vmem:[%s111 + $0x20] sm:$0xff]
      %144 = vrot.lane.b32.xlu0 %v139, 32
      %v145 = vpop.permute.xlu0 %144
      %v146 = vsel %vm121, %v145, %v139
      %147 = vrot.lane.b32.xlu0 %v146, 16
      %v148 = vpop.permute.xlu0 %147
      %v149 = vsel %vm124, %v148, %v146
      %150 = vrot.lane.b32.xlu0 %v149, 8
      %v151 = vpop.permute.xlu0 %150
      %v152 = vsel %vm127, %v151, %v149
      %153 = vrot.lane.b32.xlu0 %v152, 4
      %v154 = vpop.permute.xlu0 %153
      %v155 = vsel %vm130, %v154, %v152
      %156 = vrot.lane.b32.xlu0 %v155, 2
      %v157 = vpop.permute.xlu0 %156
      %v158 = vsel %vm133, %v157, %v155
      %159 = vrot.lane.b32.xlu0 %v158, 1
      %v160 = vpop.permute.xlu0 %159
      %v161 = vsel %vm136, %v160, %v158
      %162 = vrot.lane.b32.xlu0 %v161, 1
      %v163 = vpop.permute.xlu0 %162
      %v164 = vsel %vm138, %v163, %v161
      %165 = vst [vmem:[%s116] sm:$0xff] %v164
      %166 = vrot.lane.b32.xlu0 %v139, 64
      %v167 = vpop.permute.xlu0 %166
      %168 = vrot.lane.b32.xlu0 %v167, 32
      %v169 = vpop.permute.xlu0 %168
      %v170 = vsel %vm121, %v169, %v167
      %171 = vrot.lane.b32.xlu0 %v170, 16
      %v172 = vpop.permute.xlu0 %171
      %v173 = vsel %vm124, %v172, %v170
      %174 = vrot.lane.b32.xlu0 %v173, 8
      %v175 = vpop.permute.xlu0 %174
      %v176 = vsel %vm127, %v175, %v173
      %177 = vrot.lane.b32.xlu0 %v176, 4
      %v178 = vpop.permute.xlu0 %177
      %v179 = vsel %vm130, %v178, %v176
      %180 = vrot.lane.b32.xlu0 %v179, 2
      %v181 = vpop.permute.xlu0 %180
      %v182 = vsel %vm133, %v181, %v179
      %183 = vrot.lane.b32.xlu0 %v182, 1
      %v184 = vpop.permute.xlu0 %183
      %v185 = vsel %vm136, %v184, %v182
      %186 = vrot.lane.b32.xlu0 %v185, 1
      %v187 = vpop.permute.xlu0 %186
      %v188 = vsel %vm138, %v187, %v185
      %189 = vst [vmem:[%s116 + $0x8] sm:$0xff] %v188
      %190 = vrot.lane.b32.xlu0 %v140, 32
      %v191 = vpop.permute.xlu0 %190
      %v192 = vsel %vm121, %v191, %v140
      %193 = vrot.lane.b32.xlu0 %v192, 16
      %v194 = vpop.permute.xlu0 %193
      %v195 = vsel %vm124, %v194, %v192
      %196 = vrot.lane.b32.xlu0 %v195, 8
      %v197 = vpop.permute.xlu0 %196
      %v198 = vsel %vm127, %v197, %v195
      %199 = vrot.lane.b32.xlu0 %v198, 4
      %v200 = vpop.permute.xlu0 %199
      %v201 = vsel %vm130, %v200, %v198
      %202 = vrot.lane.b32.xlu0 %v201, 2
      %v203 = vpop.permute.xlu0 %202
      %v204 = vsel %vm133, %v203, %v201
      %205 = vrot.lane.b32.xlu0 %v204, 1
      %v206 = vpop.permute.xlu0 %205
      %v207 = vsel %vm136, %v206, %v204
      %208 = vrot.lane.b32.xlu0 %v207, 1
      %v209 = vpop.permute.xlu0 %208
      %v210 = vsel %vm138, %v209, %v207
      %211 = vst [vmem:[%s116 + $0x10] sm:$0xff] %v210
      %212 = vrot.lane.b32.xlu0 %v140, 64
      %v213 = vpop.permute.xlu0 %212
      %214 = vrot.lane.b32.xlu0 %v213, 32
      %v215 = vpop.permute.xlu0 %214
      %v216 = vsel %vm121, %v215, %v213
      %217 = vrot.lane.b32.xlu0 %v216, 16
      %v218 = vpop.permute.xlu0 %217
      %v219 = vsel %vm124, %v218, %v216
      %220 = vrot.lane.b32.xlu0 %v219, 8
      %v221 = vpop.permute.xlu0 %220
      %v222 = vsel %vm127, %v221, %v219
      %223 = vrot.lane.b32.xlu0 %v222, 4
      %v224 = vpop.permute.xlu0 %223
      %v225 = vsel %vm130, %v224, %v222
      %226 = vrot.lane.b32.xlu0 %v225, 2
      %v227 = vpop.permute.xlu0 %226
      %v228 = vsel %vm133, %v227, %v225
      %229 = vrot.lane.b32.xlu0 %v228, 1
      %v230 = vpop.permute.xlu0 %229
      %v231 = vsel %vm136, %v230, %v228
      %232 = vrot.lane.b32.xlu0 %v231, 1
      %v233 = vpop.permute.xlu0 %232
      %v234 = vsel %vm138, %v233, %v231
      %235 = vst [vmem:[%s116 + $0x18] sm:$0xff] %v234
      %236 = vrot.lane.b32.xlu0 %v141, 32
      %v237 = vpop.permute.xlu0 %236
      %v238 = vsel %vm121, %v237, %v141
      %239 = vrot.lane.b32.xlu0 %v238, 16
      %v240 = vpop.permute.xlu0 %239
      %v241 = vsel %vm124, %v240, %v238
      %242 = vrot.lane.b32.xlu0 %v241, 8
      %v243 = vpop.permute.xlu0 %242
      %v244 = vsel %vm127, %v243, %v241
      %245 = vrot.lane.b32.xlu0 %v244, 4
      %v246 = vpop.permute.xlu0 %245
      %v247 = vsel %vm130, %v246, %v244
      %248 = vrot.lane.b32.xlu0 %v247, 2
      %v249 = vpop.permute.xlu0 %248
      %v250 = vsel %vm133, %v249, %v247
      %251 = vrot.lane.b32.xlu0 %v250, 1
      %v252 = vpop.permute.xlu0 %251
      %v253 = vsel %vm136, %v252, %v250
      %254 = vrot.lane.b32.xlu0 %v253, 1
      %v255 = vpop.permute.xlu0 %254
      %v256 = vsel %vm138, %v255, %v253
      %257 = vst [vmem:[%s116 + $0x20] sm:$0xff] %v256
      %258 = vrot.lane.b32.xlu0 %v141, 64
      %v259 = vpop.permute.xlu0 %258
      %260 = vrot.lane.b32.xlu0 %v259, 32
      %v261 = vpop.permute.xlu0 %260
      %v262 = vsel %vm121, %v261, %v259
      %263 = vrot.lane.b32.xlu0 %v262, 16
      %v264 = vpop.permute.xlu0 %263
      %v265 = vsel %vm124, %v264, %v262
      %266 = vrot.lane.b32.xlu0 %v265, 8
      %v267 = vpop.permute.xlu0 %266
      %v268 = vsel %vm127, %v267, %v265
      %269 = vrot.lane.b32.xlu0 %v268, 4
      %v270 = vpop.permute.xlu0 %269
      %v271 = vsel %vm130, %v270, %v268
      %272 = vrot.lane.b32.xlu0 %v271, 2
      %v273 = vpop.permute.xlu0 %272
      %v274 = vsel %vm133, %v273, %v271
      %275 = vrot.lane.b32.xlu0 %v274, 1
      %v276 = vpop.permute.xlu0 %275
      %v277 = vsel %vm136, %v276, %v274
      %278 = vrot.lane.b32.xlu0 %v277, 1
      %v279 = vpop.permute.xlu0 %278
      %v280 = vsel %vm138, %v279, %v277
      %281 = vst [vmem:[%s116 + $0x28] sm:$0xff] %v280
      %282 = vrot.lane.b32.xlu0 %v142, 32
      %v283 = vpop.permute.xlu0 %282
      %v284 = vsel %vm121, %v283, %v142
      %285 = vrot.lane.b32.xlu0 %v284, 16
      %v286 = vpop.permute.xlu0 %285
      %v287 = vsel %vm124, %v286, %v284
      %288 = vrot.lane.b32.xlu0 %v287, 8
      %v289 = vpop.permute.xlu0 %288
      %v290 = vsel %vm127, %v289, %v287
      %291 = vrot.lane.b32.xlu0 %v290, 4
      %v292 = vpop.permute.xlu0 %291
      %v293 = vsel %vm130, %v292, %v290
      %294 = vrot.lane.b32.xlu0 %v293, 2
      %v295 = vpop.permute.xlu0 %294
      %v296 = vsel %vm133, %v295, %v293
      %297 = vrot.lane.b32.xlu0 %v296, 1
      %v298 = vpop.permute.xlu0 %297
      %v299 = vsel %vm136, %v298, %v296
      %300 = vrot.lane.b32.xlu0 %v299, 1
      %v301 = vpop.permute.xlu0 %300
      %v302 = vsel %vm138, %v301, %v299
      %303 = vst [vmem:[%s116 + $0x30] sm:$0xff] %v302
      %304 = vrot.lane.b32.xlu0 %v142, 64
      %v305 = vpop.permute.xlu0 %304
      %306 = vrot.lane.b32.xlu0 %v305, 32
      %v307 = vpop.permute.xlu0 %306
      %v308 = vsel %vm121, %v307, %v305
      %309 = vrot.lane.b32.xlu0 %v308, 16
      %v310 = vpop.permute.xlu0 %309
      %v311 = vsel %vm124, %v310, %v308
      %312 = vrot.lane.b32.xlu0 %v311, 8
      %v313 = vpop.permute.xlu0 %312
      %v314 = vsel %vm127, %v313, %v311
      %315 = vrot.lane.b32.xlu0 %v314, 4
      %v316 = vpop.permute.xlu0 %315
      %v317 = vsel %vm130, %v316, %v314
      %318 = vrot.lane.b32.xlu0 %v317, 2
      %v319 = vpop.permute.xlu0 %318
      %v320 = vsel %vm133, %v319, %v317
      %321 = vrot.lane.b32.xlu0 %v320, 1
      %v322 = vpop.permute.xlu0 %321
      %v323 = vsel %vm136, %v322, %v320
      %324 = vrot.lane.b32.xlu0 %v323, 1
      %v325 = vpop.permute.xlu0 %324
      %v326 = vsel %vm138, %v325, %v323
      %327 = vst [vmem:[%s116 + $0x38] sm:$0xff] %v326
      %328 = vrot.lane.b32.xlu0 %v143, 32
      %v329 = vpop.permute.xlu0 %328
      %v330 = vsel %vm121, %v329, %v143
      %331 = vrot.lane.b32.xlu0 %v330, 16
      %v332 = vpop.permute.xlu0 %331
      %v333 = vsel %vm124, %v332, %v330
      %334 = vrot.lane.b32.xlu0 %v333, 8
      %v335 = vpop.permute.xlu0 %334
      %v336 = vsel %vm127, %v335, %v333
      %337 = vrot.lane.b32.xlu0 %v336, 4
      %v338 = vpop.permute.xlu0 %337
      %v339 = vsel %vm130, %v338, %v336
      %340 = vrot.lane.b32.xlu0 %v339, 2
      %v341 = vpop.permute.xlu0 %340
      %v342 = vsel %vm133, %v341, %v339
      %343 = vrot.lane.b32.xlu0 %v342, 1
      %v344 = vpop.permute.xlu0 %343
      %v345 = vsel %vm136, %v344, %v342
      %346 = vrot.lane.b32.xlu0 %v345, 1
      %v347 = vpop.permute.xlu0 %346
      %v348 = vsel %vm138, %v347, %v345
      %349 = vst [vmem:[%s116 + $0x40] sm:$0xff] %v348
      %350 = vrot.lane.b32.xlu0 %v143, 64
      %v351 = vpop.permute.xlu0 %350
      %352 = vrot.lane.b32.xlu0 %v351, 32
      %v353 = vpop.permute.xlu0 %352
      %v354 = vsel %vm121, %v353, %v351
      %355 = vrot.lane.b32.xlu0 %v354, 16
      %v356 = vpop.permute.xlu0 %355
      %v357 = vsel %vm124, %v356, %v354
      %358 = vrot.lane.b32.xlu0 %v357, 8
      %v359 = vpop.permute.xlu0 %358
      %v360 = vsel %vm127, %v359, %v357
      %361 = vrot.lane.b32.xlu0 %v360, 4
      %v362 = vpop.permute.xlu0 %361
      %v363 = vsel %vm130, %v362, %v360
      %364 = vrot.lane.b32.xlu0 %v363, 2
      %v365 = vpop.permute.xlu0 %364
      %v366 = vsel %vm133, %v365, %v363
      %367 = vrot.lane.b32.xlu0 %v366, 1
      %v368 = vpop.permute.xlu0 %367
      %v369 = vsel %vm136, %v368, %v366
      %370 = vrot.lane.b32.xlu0 %v369, 1
      %v371 = vpop.permute.xlu0 %370
      %v372 = vsel %vm138, %v371, %v369
      %373 = vst [vmem:[%s116 + $0x48] sm:$0xff] %v372
      %p374 = scmp.lt.s32.totalorder %s12, 1
      %s375 = scalar_select %p374, %s12, 1
      %s376 = smul.addr %s375, 10
      %s377 = smul.addr %s376, 8
      %s378 = scalar_lea.vmem %s1, %s377
      // Predicated region
      $region25: #{up_body2part.1} parent=23 // pred_check
        %p379 = pneg %p56
      $region26: #{up_body2part.1} parent=23 // pred_check_branch
        %381 = sbr.rel (%p379) target = $region28
      $region27: #{up_body2part.1} parent=23 // pred_region
        _
      $region28: #{up_body2part.1} parent=23 // pred_fallthru
        _
    $region24: #{up_body2part.1} parent=5 // pred_fallthru
      _
    %p382 = scmp.le.s32.totalorder 2, %s7
    // Predicated region
    $region29: #{up_body2part.1} parent=5 // pred_check
      %p383 = pneg %p382
    $region30: #{up_body2part.1} parent=5 // pred_check_branch
      %385 = sbr.rel (%p383) target = $region32
    $region31: #{up_body2part.1} parent=5 // pred_region
      %s386 = ssub.s32 %s7, 2
      // Predicated region
      $region33: #{up_body2part.1} parent=31 // pred_check
        %p387 = pneg %p62
      $region34: #{up_body2part.1} parent=31 // pred_check_branch
        %389 = sbr.rel (%p387) target = $region36
      $region35: #{up_body2part.1} parent=31 // pred_region
        %p390 = scmp.lt.s32.totalorder %s13, 1
        %s391 = scalar_select %p390, %s13, 1
        %s392 = smul.addr %s391, 10
        %s393 = smul.addr %s392, 8
        %s394 = scalar_lea.vmem %s1, %s393
      $region36: #{up_body2part.1} parent=31 // pred_fallthru
        _
    $region32: #{up_body2part.1} parent=5 // pred_fallthru
      _
  $region6: #{up_body2part.1} parent=0 // loop_footer
    %s11 = sadd.s32 1, %s7
  $region7: #{up_body2part.1} parent=0 // loop_footer_branch
    %6 = sbr.rel target = $region3
  $region8: #{up_body2part.1} parent=0 // loop_exit
    _

</llo_original>
